<compile_context>
chip_gen: v7x
topology: tpu7x:2x2x1
jax: 0.10.0
libtpu: 0.0.40
codegen_flags: <defaults>
</compile_context>

<pallas_src>
import functools

import jax
import jax.numpy as jnp
from jax.experimental import pallas as pl
from jax.experimental.pallas import tpu as pltpu


def _gcn_kernel(text_ref, adj_ref, w_ref, b_ref, out_ref, hidden_ref,
                *, f_out, use_ones_col):
    """One grid step: out[bblk, rtile] = (adj_tile @ hidden) / denom + bias.

    text_ref  : (TB, N, F_in)     native dtype (cast to bf16 in-kernel)
    adj_ref   : (TB, TM, N)       streamed dtype (bf16 by default)
    w_ref     : (F_in, F_out_p)   bf16
    b_ref     : (1, F_out_p)      f32
    out_ref   : (TB, TM, F_out)   f32 (unpadded feature dim)
    hidden_ref: (TB, N, F_out_p)  bf16 VMEM scratch, resident across row tiles
    """
    TB, N, F_in = text_ref.shape
    F_out_p = w_ref.shape[1]

    # hidden = text @ W -- computed once per batch block.  The row-tile grid
    # axis is "arbitrary", so all row tiles of a batch block run consecutively
    # on the same core and reuse this scratch.
    @pl.when(pl.program_id(1) == 0)
    def _():
        t = text_ref[...].astype(jnp.bfloat16).reshape(TB * N, F_in)
        h = jnp.dot(t, w_ref[...], preferred_element_type=jnp.float32)
        h = h.reshape(TB, N, F_out_p)
        if use_ones_col:
            # Plant a column of ones in the (zero) padded lane `f_out`: the
            # aggregation matmul then yields adj.sum(-1) in that lane for free
            # on the MXU (exact: 0/1 products, f32 accumulation).
            lane = jax.lax.broadcasted_iota(jnp.int32, (TB, N, F_out_p), 2)
            h = jnp.where(lane == f_out, 1.0, h)
        hidden_ref[...] = h.astype(hidden_ref.dtype)

    adj = adj_ref[...]                                     # keep streamed dtype

    # Batched aggregation on the MXU: bf16 x bf16 -> f32 accumulate.
    agg = jnp.einsum(
        "bmn,bnf->bmf", adj, hidden_ref[...],
        preferred_element_type=jnp.float32,
    )                                                      # (TB, TM, F_out_p)

    if use_ones_col:
        denom = agg[..., f_out:f_out + 1] + 1.0            # adj.sum(-1) + 1
    else:
        # No spare padded lane (F_out % 128 == 0): explicit row-sum fallback.
        denom = jnp.sum(adj.astype(jnp.float32), axis=-1, keepdims=True) + 1.0

    inv = pl.reciprocal(denom, approx=True)                # EUP, ~2^-12 error

    # Zero bias is passed when bias is None -- the add is a fused VPU op.
    res = agg * inv + b_ref[...]                           # padded lanes unused
    out_ref[...] = res[..., :f_out].astype(out_ref.dtype)


def _round_up(x, m):
    return (x + m - 1) // m * m


def _largest_divisor(n, cap):
    """Largest t <= cap with n % t == 0 (>= 1)."""
    for t in range(min(cap, n), 0, -1):
        if n % t == 0:
            return t
    return 1


def graph_convolution(text, adj, weight, bias=None, *, adj_dtype=jnp.bfloat16):
    """Pallas GCN forward.

    text: (B, N, F_in), adj: (B, N, N), weight: (F_in, F_out), bias: (F_out,).

    adj is streamed to the MXU in `adj_dtype` (default bf16): exact for the
    usual 0/1 adjacency and halves HBM traffic on the dominant B*N*N stream.
    Pass adj_dtype=jnp.float32 for weighted adjacencies that need full
    precision (at the cost of 2x adj bytes and a slower MXU path).
    """
    B, N, F_in = text.shape
    F_out = weight.shape[1]
    assert adj.shape == (B, N, N)
    assert weight.shape == (F_in, F_out)

    # ---- lane-dense feature padding (MXU-friendly hidden / weight) ----------
    F_out_p = _round_up(max(F_out, 128), 128)
    use_ones_col = F_out < F_out_p      # spare padded lane for the MXU row-sum

    w_p = jnp.pad(weight.astype(jnp.bfloat16), ((0, 0), (0, F_out_p - F_out)))
    if bias is None:
        b_p = jnp.zeros((1, F_out_p), dtype=jnp.float32)
    else:
        b_p = jnp.pad(bias.astype(jnp.float32).reshape(1, F_out),
                      ((0, 0), (0, F_out_p - F_out)))

    adj_in = adj.astype(adj_dtype)

    # ---- generation-aware VMEM budget ----------------------------------------
    try:
        vmem_cap = int(pltpu.get_tpu_info().vmem_capacity_bytes)
    except Exception:
        vmem_cap = 64 * 1024 * 1024     # conservative: v7x per-core VMEM
    budget = vmem_cap // 2              # headroom for compiler temporaries

    adj_bytes = jnp.dtype(adj_dtype).itemsize
    text_bytes = text.dtype.itemsize

    # ---- batch packing (small graphs) ----------------------------------------
    # Pack several batches per grid step to fill the 256-row MXU and amortize
    # the ~0.35us per-step overhead, but keep B // TB >= 2 so both v7x
    # TensorCores get batch blocks (the batch axis is the "parallel" one).
    if N % 8 == 0 and N < 512:
        tb_cap = max(1, B // 2) if B >= 2 else 1
        TB = _largest_divisor(B, min(max(1, 512 // N), tb_cap))
    else:
        TB = 1

    # ---- adjacency row-tile selection from the VMEM budget -------------------
    # Fixed per-batch-block footprint: bf16 hidden scratch, resident text
    # (double-buffered), weight, bias.
    fixed = (TB * N * F_out_p * 2
             + 2 * TB * N * F_in * text_bytes
             + 2 * F_in * F_out_p * 2
             + 2 * F_out_p * 4)
    # Per adjacency row: adj slab + output rows, both double-buffered.
    per_row = 2 * TB * N * adj_bytes + 2 * TB * F_out * 4
    tm_cap = max(8, min(512, (budget - fixed) // max(per_row, 1)))
    tm_cap -= tm_cap % 8
    tm_cap = max(tm_cap, 8)

    if N <= tm_cap:
        TM, N_r = N, N
    else:
        TM = 0
        for t in range(tm_cap, 7, -8):
            if N % t == 0:
                TM = t
                break
        if TM >= 128:
            N_r = N
        else:
            # Awkward (prime-ish) N: pad adjacency rows instead of falling back
            # to an unbounded (N, N) slab.  Padded rows are all-zero and are
            # sliced off below.
            TM = min(tm_cap, 256)
            TM -= TM % 8
            TM = max(TM, 8)
            N_r = _round_up(N, TM)
            adj_in = jnp.pad(adj_in, ((0, 0), (0, N_r - N), (0, 0)))

    grid = (B // TB, N_r // TM)

    # Explicit scoped-VMEM limit: v5e defaults to only 16 MiB scoped; keep it
    # comfortably inside physical capacity on every generation.
    vmem_limit = int(min(0.85 * vmem_cap, 100 * 1024 * 1024))
    vmem_limit = max(vmem_limit, 32 * 1024 * 1024)

    # Advisory cost estimate so XLA schedules the custom call sensibly.
    flops = 2.0 * B * N * F_in * F_out_p + 2.0 * B * N_r * N * F_out_p
    bytes_accessed = (text.size * text_bytes
                      + B * N_r * N * adj_bytes
                      + w_p.size * 2 + b_p.size * 4
                      + B * N_r * F_out * 4)
    cost = pl.CostEstimate(flops=int(flops), transcendentals=0,
                           bytes_accessed=int(bytes_accessed))

    kernel = functools.partial(_gcn_kernel, f_out=F_out,
                               use_ones_col=use_ones_col)

    out = pl.pallas_call(
        kernel,
        out_shape=jax.ShapeDtypeStruct((B, N_r, F_out), jnp.float32),
        grid_spec=pltpu.PrefetchScalarGridSpec(
            num_scalar_prefetch=0,
            grid=grid,
            in_specs=[
                # text: resident across the row-tile axis (same block index).
                pl.BlockSpec((TB, N, F_in), lambda bi, ri: (bi, 0, 0)),
                # adj: streamed as (TB, TM, N) row slabs in bf16.
                pl.BlockSpec((TB, TM, N), lambda bi, ri: (bi, ri, 0)),
                # weight / bias: single block, DMA'd once, resident.
                pl.BlockSpec((F_in, F_out_p), lambda bi, ri: (0, 0)),
                pl.BlockSpec((1, F_out_p), lambda bi, ri: (0, 0)),
            ],
            # Unpadded feature dim on the output: no padded-slab writeback and
            # no extra wrapper-side slicing pass over HBM.
            out_specs=pl.BlockSpec((TB, TM, F_out), lambda bi, ri: (bi, ri, 0)),
            scratch_shapes=[pltpu.VMEM((TB, N, F_out_p), jnp.bfloat16)],
        ),
        compiler_params=pltpu.CompilerParams(
            # Row-tile axis must be "arbitrary": the hidden scratch is computed
            # at ri == 0 and reused, so it cannot be split across cores.
            dimension_semantics=("parallel", "arbitrary"),
            vmem_limit_bytes=vmem_limit,
        ),
        cost_estimate=cost,
    )(text, adj_in, w_p, b_p)

    if N_r != N:
        out = out[:, :N]
    return out


def graph_convolution_ref(text, adj, weight, bias=None):
    """Pure-JAX reference mirroring the PyTorch forward exactly."""
    text = text.astype(jnp.float32)
    hidden = jnp.matmul(text, weight)
    denom = jnp.sum(adj, axis=2, keepdims=True) + 1.0
    output = jnp.matmul(adj, hidden) / denom
    if bias is not None:
        output = output + bias
    return output


if __name__ == "__main__":
    # Small, deterministic example shapes.
    B, N, F_in, F_out = 2, 16, 32, 24

    key = jax.random.PRNGKey(0)
    k_text, k_adj, k_w, k_b = jax.random.split(key, 4)

    text = jax.random.normal(k_text, (B, N, F_in), dtype=jnp.float32)
    # Adjacency-like matrix: 0/1 valued (bf16 streaming is exact for these).
    adj = (jax.random.uniform(k_adj, (B, N, N)) > 0.5).astype(jnp.float32)

    # Deterministic parameter init (uniform +/- 1/sqrt(F_out), GCN-style).
    stdv = 1.0 / (F_out ** 0.5)
    weight = jax.random.uniform(k_w, (F_in, F_out), minval=-stdv, maxval=stdv,
                                dtype=jnp.float32)
    bias = jax.random.uniform(k_b, (F_out,), minval=-stdv, maxval=stdv,
                              dtype=jnp.float32)

    out = graph_convolution(text, adj, weight, bias)
    out = jax.block_until_ready(out)

    ref = graph_convolution_ref(text, adj, weight, bias)
    assert out.shape == (B, N, F_out)
    # bf16 MXU path (text / weight / hidden / adj in bf16, f32 accumulate) plus
    # the approximate reciprocal give ~1e-3 relative error vs the f32 PyTorch
    # reference; the 0/1 adjacency and its row-sums are exact.
    assert jnp.allclose(out, ref, atol=2e-2, rtol=2e-2), "mismatch vs reference"

    print("KERNEL_OK")
</pallas_src>

<mosaic_0001>
module attributes {stable_mosaic.version = 11 : i64} {
  func.func @_gcn_kernel(%arg0: i32, %arg1: i32, %arg2: memref<1x16x32xf32, #tpu.memory_space<vmem>>, %arg3: memref<1x16x16xbf16, #tpu.memory_space<vmem>>, %arg4: memref<32x128xbf16, #tpu.memory_space<vmem>>, %arg5: memref<1x128xf32, #tpu.memory_space<vmem>>, %arg6: memref<1x16x24xf32, #tpu.memory_space<vmem>>, %arg7: memref<1x16x128xbf16, #tpu.memory_space<vmem>>) attributes {dimension_semantics = [#tpu.dimension_semantics<parallel>, #tpu.dimension_semantics<arbitrary>], iteration_bounds = array<i64: 2, 1>, scalar_prefetch = 0 : i64, scratch_operands = 1 : i64, tpu.core_type = #tpu.core_type<tc>, window_params = [{transform_indices = @transform_0, window_bounds = array<i64: 1, 16, 32>}, {transform_indices = @transform_1, window_bounds = array<i64: 1, 16, 16>}, {pipeline_mode = #tpu.pipeline_mode<synchronous>, transform_indices = @transform_2, window_bounds = array<i64: 32, 128>}, {pipeline_mode = #tpu.pipeline_mode<synchronous>, transform_indices = @transform_3, window_bounds = array<i64: 1, 128>}, {transform_indices = @transform_4, window_bounds = array<i64: 1, 16, 24>}]} {
    %c0_i32 = arith.constant 0 : i32
    %0 = arith.cmpi eq, %arg1, %c0_i32 : i32
    %1 = arith.extui %0 : i1 to i32
    %c0_i32_0 = arith.constant 0 : i32
    %2 = arith.cmpi ne, %1, %c0_i32_0 : i32
    scf.if %2 {
      %c0_12 = arith.constant 0 : index
      %c0_13 = arith.constant 0 : index
      %c0_14 = arith.constant 0 : index
      %18 = vector.load %arg2[%c0_12, %c0_13, %c0_14] : memref<1x16x32xf32, #tpu.memory_space<vmem>>, vector<1x16x32xf32>
      %19 = arith.truncf %18 : vector<1x16x32xf32> to vector<1x16x32xbf16>
      %20 = vector.shape_cast %19 : vector<1x16x32xbf16> to vector<16x32xbf16>
      %c0_15 = arith.constant 0 : index
      %c0_16 = arith.constant 0 : index
      %21 = vector.load %arg4[%c0_15, %c0_16] : memref<32x128xbf16, #tpu.memory_space<vmem>>, vector<32x128xbf16>
      %cst_17 = arith.constant dense<0.000000e+00> : vector<16x128xf32>
      %22 = tpu.matmul %20, %21, %cst_17 {dimension_numbers = #tpu.dot_dimension_numbers<[1], [0], [0], [1], [0, 0, 1, 1], [], []>} : vector<16x32xbf16>, vector<32x128xbf16>, vector<16x128xf32> -> vector<16x128xf32>
      %23 = vector.shape_cast %22 : vector<16x128xf32> to vector<1x16x128xf32>
      %24 = tpu.iota {dimensions = array<i32: 2>} : vector<1x16x128xi32>
      %c24_i32 = arith.constant 24 : i32
      %25 = vector.broadcast %c24_i32 : i32 to vector<1x16x128xi32>
      %26 = arith.cmpi eq, %24, %25 : vector<1x16x128xi32>
      %cst_18 = arith.constant 1.000000e+00 : f32
      %27 = vector.broadcast %cst_18 : f32 to vector<1x16x128xf32>
      %28 = arith.select %26, %27, %23 : vector<1x16x128xi1>, vector<1x16x128xf32>
      %29 = arith.truncf %28 : vector<1x16x128xf32> to vector<1x16x128xbf16>
      %c0_19 = arith.constant 0 : index
      %c0_20 = arith.constant 0 : index
      %c0_21 = arith.constant 0 : index
      %30 = vector.load %arg7[%c0_19, %c0_20, %c0_21] : memref<1x16x128xbf16, #tpu.memory_space<vmem>>, vector<1x16x128xbf16>
      tpu.vector_store %arg7[%c0_19, %c0_20, %c0_21], %29 {strides = array<i32>} : memref<1x16x128xbf16, #tpu.memory_space<vmem>>, vector<1x16x128xbf16>,
    } else {
    }
    %c0 = arith.constant 0 : index
    %c0_1 = arith.constant 0 : index
    %c0_2 = arith.constant 0 : index
    %3 = vector.load %arg3[%c0, %c0_1, %c0_2] : memref<1x16x16xbf16, #tpu.memory_space<vmem>>, vector<1x16x16xbf16>
    %c0_3 = arith.constant 0 : index
    %c0_4 = arith.constant 0 : index
    %c0_5 = arith.constant 0 : index
    %4 = vector.load %arg7[%c0_3, %c0_4, %c0_5] : memref<1x16x128xbf16, #tpu.memory_space<vmem>>, vector<1x16x128xbf16>
    "tpu.trace_start"() <{level = 10 : i32, message = "bmn,bnf->bmf"}> : () -> ()
    %cst = arith.constant dense<0.000000e+00> : vector<1x16x128xf32>
    %5 = tpu.matmul %3, %4, %cst {dimension_numbers = #tpu.dot_dimension_numbers<[2], [1], [1], [2], [0, 0, 0, 1, 1, 2], [0], [0]>} : vector<1x16x16xbf16>, vector<1x16x128xbf16>, vector<1x16x128xf32> -> vector<1x16x128xf32>
    "tpu.trace_stop"() : () -> ()
    %6 = vector.extract_strided_slice %5 {offsets = [0, 0, 24], sizes = [1, 16, 1], strides = [1, 1, 1]} : vector<1x16x128xf32> to vector<1x16x1xf32>
    %cst_6 = arith.constant 1.000000e+00 : f32
    %7 = vector.broadcast %cst_6 : f32 to vector<1x16x1xf32>
    %8 = arith.addf %6, %7 : vector<1x16x1xf32>
    %9 = tpu.reciprocal %8 {approx = true} : vector<1x16x1xf32> -> vector<1x16x1xf32>
    %10 = vector.broadcast %9 : vector<1x16x1xf32> to vector<1x16x128xf32>
    %11 = arith.mulf %5, %10 : vector<1x16x128xf32>
    %c0_7 = arith.constant 0 : index
    %c0_8 = arith.constant 0 : index
    %12 = vector.load %arg5[%c0_7, %c0_8] : memref<1x128xf32, #tpu.memory_space<vmem>>, vector<1x128xf32>
    %13 = vector.shape_cast %12 : vector<1x128xf32> to vector<1x1x128xf32>
    %14 = vector.broadcast %13 : vector<1x1x128xf32> to vector<1x16x128xf32>
    %15 = arith.addf %11, %14 : vector<1x16x128xf32>
    %16 = vector.extract_strided_slice %15 {offsets = [0, 0, 0], sizes = [1, 16, 24], strides = [1, 1, 1]} : vector<1x16x128xf32> to vector<1x16x24xf32>
    %c0_9 = arith.constant 0 : index
    %c0_10 = arith.constant 0 : index
    %c0_11 = arith.constant 0 : index
    %17 = vector.load %arg6[%c0_9, %c0_10, %c0_11] : memref<1x16x24xf32, #tpu.memory_space<vmem>>, vector<1x16x24xf32>
    tpu.vector_store %arg6[%c0_9, %c0_10, %c0_11], %16 {strides = array<i32>} : memref<1x16x24xf32, #tpu.memory_space<vmem>>, vector<1x16x24xf32>,
    return
  }
  func.func @transform_0(%arg0: i32, %arg1: i32) -> (i32, i32, i32) {
    %c0_i32 = arith.constant 0 : i32
    %c0_i32_0 = arith.constant 0 : i32
    %c0_i32_1 = arith.constant 0 : i32
    return %arg0, %c0_i32, %c0_i32_0 : i32, i32, i32
  }
  func.func @transform_1(%arg0: i32, %arg1: i32) -> (i32, i32, i32) {
    %c0_i32 = arith.constant 0 : i32
    %c0_i32_0 = arith.constant 0 : i32
    return %arg0, %arg1, %c0_i32 : i32, i32, i32
  }
  func.func @transform_2(%arg0: i32, %arg1: i32) -> (i32, i32) {
    %c0_i32 = arith.constant 0 : i32
    %c0_i32_0 = arith.constant 0 : i32
    %c0_i32_1 = arith.constant 0 : i32
    return %c0_i32, %c0_i32_0 : i32, i32
  }
  func.func @transform_3(%arg0: i32, %arg1: i32) -> (i32, i32) {
    %c0_i32 = arith.constant 0 : i32
    %c0_i32_0 = arith.constant 0 : i32
    %c0_i32_1 = arith.constant 0 : i32
    return %c0_i32, %c0_i32_0 : i32, i32
  }
  func.func @transform_4(%arg0: i32, %arg1: i32) -> (i32, i32, i32) {
    %c0_i32 = arith.constant 0 : i32
    %c0_i32_0 = arith.constant 0 : i32
    return %arg0, %arg1, %c0_i32 : i32, i32, i32
  }
}

</mosaic_0001>

<llo_original>
// kernel: tpu_custom_call.1
$region0: #{tpu_custom_call.1}
  #allocation0 [shape = 'u32[]', space=smem, size = 0x4, offset = 0x4, fixed_abs, tag = 'smem constant byte address 0x4 - core index']
  #allocation1 [shape = 'u32[144,128]{1,0:T(1,128)}', space=vmem, size = 0x12000, scoped, tag = 'internal scratch']
  #allocation2 [shape = 'bf16[1,16,128]{2,1,0:T(16,128)(2,1)}', space=vmem, size = 0x1000, scoped, tag = 'scratch operand']
  %s0 = inlined_call_operand.hbm [shape: f32[2,16,32], index: 0, kind: input, shape index: {}]
  %s1 = inlined_call_operand.hbm [shape: bf16[2,16,16], index: 1, kind: input, shape index: {}]
  %s2 = inlined_call_operand.hbm [shape: bf16[32,128], index: 2, kind: input, shape index: {}]
  %s3 = inlined_call_operand.vmem [shape: f32[1,128], index: 3, kind: input, shape index: {}]
  %s4 = inlined_call_operand.hbm [shape: f32[2,16,24], index: 4, kind: output, shape index: {}]
  %s5 = sld [smem:[#allocation0]]
  $region65: #{tpu_custom_call.1} parent=0
    _
  %s7 = ssub.s32 1, %s5
  %s8 = scalar_select 0, %s7, %s5
  $region1: #{tpu_custom_call.1} parent=0
    #allocation3 [shape = 'u8[16384]{0}', space=vmem, size = 0x4000, scoped, tag = 'input window, operand 0']
    #allocation4 [shape = 's32[2]{0}', space=sflag, size = 0x8, scoped, tag = 'scoped memory for tpu_custom_call.1']
    #allocation5 [shape = 's32[2]{0}', space=sflag, size = 0x8, scoped, tag = 'scoped memory for tpu_custom_call.1']
    #allocation6 [shape = 'u8[8192]{0}', space=vmem, size = 0x2000, scoped, tag = 'input window, operand 1']
    #allocation7 [shape = 's32[2]{0}', space=sflag, size = 0x8, scoped, tag = 'scoped memory for tpu_custom_call.1']
    #allocation8 [shape = 'u8[8192]{0}', space=vmem, size = 0x2000, scoped, tag = 'input window, operand 2, single buffered']
    #allocation9 [shape = 'u8[16384]{0}', space=vmem, size = 0x4000, scoped, tag = 'output window, operand 0']
    %9 = vsyncpa [#allocation4], 0
    %s10 = scalar_lea.sflag [#allocation4], 1
    %11 = vsyncpa %s10, 0
    %12 = vsyncpa [#allocation7], 0
    %s13 = scalar_lea.sflag [#allocation7], 1
    %14 = vsyncpa %s13, 0
    %15 = vsyncpa [#allocation5], 0
    %s16 = scalar_lea.sflag [#allocation5], 1
    %17 = vsyncpa %s16, 0
    loop: start=0, step=1, limit=4
    $region2: #{tpu_custom_call.1} parent=1 // loop_pre_header
      _
    $region3: #{tpu_custom_call.1} parent=1 // loop_header
      %s19 = sphi 0, %s23
      %p20 = scmp.ge.s32.totalorder %s19, 4
      %s26 = sphi 0, %s38
      %s27 = sphi 0, %s34
      %s28 = sphi 0, %s26
      %s29 = sphi 0, %s27
      %s30 = sphi 0, %s28
      %s31 = sphi 0, %s29
      %s41 = sphi 0, %s43
      %s44 = sphi 0, %s41
      %s45 = sphi 0, %s44
      %s61 = sphi 0, %s45
      %s69 = sphi 0, %s71
      %s72 = sphi 0, %s69
      %s73 = sphi 0, %s72
      %s89 = sphi 0, %s73
      %s93 = sphi 0, %s93
      %s95 = sphi 0, %s93
      %s96 = sphi 0, %s95
      %s110 = sphi 0, %s96
      %s114 = sphi 0, %s114
      %s116 = sphi 0, %s114
      %s117 = sphi 0, %s116
      %s131 = sphi 0, %s117
      %s139 = sphi 0, %s141
      %s142 = sphi 0, %s139
      %s143 = sphi 0, %s142
      %s159 = sphi 0, %s143
    $region4: #{tpu_custom_call.1} parent=1 // loop_header_branch
      %22 = sbr.rel (%p20) target = $region8
    $region5: #{tpu_custom_call.1} parent=1 // loop_body
      %s24 = ssub.s32 %s19, 1
      %s25 = ssub.s32 %s19, 2
      %s32 = sadd.s32 1, %s27
      %p33 = scmp.ge.s32.totalorder %s32, 1
      %s34 = scalar_select %p33, 0, %s32
      %s35 = sadd.s32 1, %s26
      %s36 = scalar_select %p33, %s35, %s26
      %p37 = scmp.ge.s32.totalorder %s36, 2
      %s38 = scalar_select %p37, 0, %s36
      %s39 = ssub.s32 %s26, %s38
      %p40 = scmp.eq.s32.totalorder %s39, 0
      %s42 = sadd.s32 %s41, 1
      %s43 = scalar_select %p40, %s41, %s42
      %p46 = pneg %p40
      %p47 = scmp.eq.s32.totalorder %s19, 1
      %p48 = por %p46, %p47
      %p49 = scmp.ne.s32.totalorder %s41, %s44
      %p50 = scmp.eq.s32.totalorder %s19, 0
      %p51 = por %p49, %p50
      %p52 = scmp.ne.s32.totalorder %s41, %s44
      %p53 = scmp.eq.s32.totalorder %s24, 1
      %p54 = por %p52, %p53
      %p55 = scmp.ne.s32.totalorder %s44, %s45
      %p56 = scmp.eq.s32.totalorder %s24, 0
      %p57 = por %p55, %p56
      %p58 = scmp.ne.s32.totalorder %s44, %s45
      %p59 = scmp.eq.s32.totalorder %s25, 1
      %p60 = por %p58, %p59
      %p62 = scmp.ne.s32.totalorder %s45, %s61
      %p63 = scmp.eq.s32.totalorder %s25, 0
      %p64 = por %p62, %p63
      %s65 = ssub.s32 %s26, %s38
      %s66 = ssub.s32 %s27, %s34
      %s67 = sor.u32 %s65, %s66
      %p68 = scmp.eq.s32.totalorder %s67, 0
      %s70 = sadd.s32 %s69, 1
      %s71 = scalar_select %p68, %s69, %s70
      %p74 = pneg %p68
      %p75 = scmp.eq.s32.totalorder %s19, 1
      %p76 = por %p74, %p75
      %p77 = scmp.ne.s32.totalorder %s69, %s72
      %p78 = scmp.eq.s32.totalorder %s19, 0
      %p79 = por %p77, %p78
      %p80 = scmp.ne.s32.totalorder %s69, %s72
      %p81 = scmp.eq.s32.totalorder %s24, 1
      %p82 = por %p80, %p81
      %p83 = scmp.ne.s32.totalorder %s72, %s73
      %p84 = scmp.eq.s32.totalorder %s24, 0
      %p85 = por %p83, %p84
      %p86 = scmp.ne.s32.totalorder %s72, %s73
      %p87 = scmp.eq.s32.totalorder %s25, 1
      %p88 = por %p86, %p87
      %p90 = scmp.ne.s32.totalorder %s73, %s89
      %p91 = scmp.eq.s32.totalorder %s25, 0
      %p92 = por %p90, %p91
      %s94 = sadd.s32 %s93, 1
      %p97 = scmp.eq.s32.totalorder %s19, 1
      %p98 = scmp.ne.s32.totalorder %s93, %s95
      %p99 = scmp.eq.s32.totalorder %s19, 0
      %p100 = por %p98, %p99
      %p101 = scmp.ne.s32.totalorder %s93, %s95
      %p102 = scmp.eq.s32.totalorder %s24, 1
      %p103 = por %p101, %p102
      %p104 = scmp.ne.s32.totalorder %s95, %s96
      %p105 = scmp.eq.s32.totalorder %s24, 0
      %p106 = por %p104, %p105
      %p107 = scmp.ne.s32.totalorder %s95, %s96
      %p108 = scmp.eq.s32.totalorder %s25, 1
      %p109 = por %p107, %p108
      %p111 = scmp.ne.s32.totalorder %s96, %s110
      %p112 = scmp.eq.s32.totalorder %s25, 0
      %p113 = por %p111, %p112
      %s115 = sadd.s32 %s114, 1
      %p118 = scmp.eq.s32.totalorder %s19, 1
      %p119 = scmp.ne.s32.totalorder %s114, %s116
      %p120 = scmp.eq.s32.totalorder %s19, 0
      %p121 = por %p119, %p120
      %p122 = scmp.ne.s32.totalorder %s114, %s116
      %p123 = scmp.eq.s32.totalorder %s24, 1
      %p124 = por %p122, %p123
      %p125 = scmp.ne.s32.totalorder %s116, %s117
      %p126 = scmp.eq.s32.totalorder %s24, 0
      %p127 = por %p125, %p126
      %p128 = scmp.ne.s32.totalorder %s116, %s117
      %p129 = scmp.eq.s32.totalorder %s25, 1
      %p130 = por %p128, %p129
      %p132 = scmp.ne.s32.totalorder %s117, %s131
      %p133 = scmp.eq.s32.totalorder %s25, 0
      %p134 = por %p132, %p133
      %s135 = ssub.s32 %s26, %s38
      %s136 = ssub.s32 %s27, %s34
      %s137 = sor.u32 %s135, %s136
      %p138 = scmp.eq.s32.totalorder %s137, 0
      %s140 = sadd.s32 %s139, 1
      %s141 = scalar_select %p138, %s139, %s140
      %p144 = pneg %p138
      %p145 = scmp.eq.s32.totalorder %s19, 1
      %p146 = por %p144, %p145
      %p147 = scmp.ne.s32.totalorder %s139, %s142
      %p148 = scmp.eq.s32.totalorder %s19, 0
      %p149 = por %p147, %p148
      %p150 = scmp.ne.s32.totalorder %s139, %s142
      %p151 = scmp.eq.s32.totalorder %s24, 1
      %p152 = por %p150, %p151
      %p153 = scmp.ne.s32.totalorder %s142, %s143
      %p154 = scmp.eq.s32.totalorder %s24, 0
      %p155 = por %p153, %p154
      %p156 = scmp.ne.s32.totalorder %s142, %s143
      %p157 = scmp.eq.s32.totalorder %s25, 1
      %p158 = por %p156, %p157
      %p160 = scmp.ne.s32.totalorder %s143, %s159
      %p161 = scmp.eq.s32.totalorder %s25, 0
      %p162 = por %p160, %p161
      %p163 = scmp.le.s32.totalorder 1, %s19
      %p164 = scmp.lt.s32.totalorder %s19, 3
      %p165 = pnand %p163, %p164
      %p166 = pneg %p165
      // Predicated region
      $region9: #{tpu_custom_call.1} parent=5 // pred_check
        _
      $region10: #{tpu_custom_call.1} parent=5 // pred_check_branch
        %168 = sbr.rel (%p165) target = $region12
      $region11: #{tpu_custom_call.1} parent=5 // pred_region
        %s169 = ssub.s32 %s19, 1
        // Predicated region
        $region13: #{tpu_custom_call.1} parent=11 // pred_check
          %p170 = pneg %p106
        $region14: #{tpu_custom_call.1} parent=11 // pred_check_branch
          %172 = sbr.rel (%p170) target = $region16
        $region15: #{tpu_custom_call.1} parent=11 // pred_region
          %s174 = ssub.s32 256, 256
          %175 = vsyncadd [#allocation7], %s174
          %s176 = sshll.u32 [#allocation8], 4
          %s177 = int_to_ptr.vmem [resolvable:$true] %s176
          %182 = dma.hbm_to_vmem [thread:$0]  %s2, 256, %s177, [#allocation7], 64, 64, 4
        $region16: #{tpu_custom_call.1} parent=11 // pred_fallthru
          _
        // Predicated region
        $region17: #{tpu_custom_call.1} parent=11 // pred_check
          %p183 = pneg %p127
        $region18: #{tpu_custom_call.1} parent=11 // pred_check_branch
          %185 = sbr.rel (%p183) target = $region20
        $region19: #{tpu_custom_call.1} parent=11 // pred_region
          _
        $region20: #{tpu_custom_call.1} parent=11 // pred_fallthru
          _
      $region12: #{tpu_custom_call.1} parent=5 // pred_fallthru
        _
      %p186 = scmp.lt.s32.totalorder %s19, 2
      // Predicated region
      $region21: #{tpu_custom_call.1} parent=5 // pred_check
        %p187 = pneg %p186
      $region22: #{tpu_custom_call.1} parent=5 // pred_check_branch
        %189 = sbr.rel (%p187) target = $region24
      $region23: #{tpu_custom_call.1} parent=5 // pred_region
        // Predicated region
        $region25: #{tpu_custom_call.1} parent=23 // pred_check
          %p190 = pneg %p51
        $region26: #{tpu_custom_call.1} parent=23 // pred_check_branch
          %192 = sbr.rel (%p190) target = $region28
        $region27: #{tpu_custom_call.1} parent=23 // pred_region
          %s193 = sand.u32 %s41, 1
          %s194 = scalar_lea.sflag [#allocation4], %s193
          %s195 = sand.u32 %s41, 1
          %s196 = smul.addr %s195, 16
          %s197 = scalar_lea.vmem [#allocation3], %s196
          %s199 = ssub.s32 256, 256
          %200 = vsyncadd %s194, %s199
          %s201 = smul.addr %s26, 2
          %s202 = smul.addr %s201, 128
          %s203 = scalar_lea.hbm %s0, %s202
          %s204 = sshll.u32 %s197, 4
          %s205 = int_to_ptr.vmem [resolvable:$true] %s204
          %210 = dma.hbm_to_vmem [thread:$0]  %s203, 256, %s205, %s194, 128, 128, 8
        $region28: #{tpu_custom_call.1} parent=23 // pred_fallthru
          _
        // Predicated region
        $region29: #{tpu_custom_call.1} parent=23 // pred_check
          %p211 = pneg %p79
        $region30: #{tpu_custom_call.1} parent=23 // pred_check_branch
          %213 = sbr.rel (%p211) target = $region32
        $region31: #{tpu_custom_call.1} parent=23 // pred_region
          %s214 = sand.u32 %s19, 1
          %s215 = scalar_lea.sflag [#allocation7], %s214
          %s216 = sand.u32 %s69, 1
          %s217 = smul.addr %s216, 8
          %s218 = scalar_lea.vmem [#allocation6], %s217
          %s219 = smul.u32 2, %s27
          %s221 = ssub.s32 128, 128
          %222 = vsyncadd %s215, %s221
          %s223 = smul.addr %s26, 2
          %s224 = sadd.s32 %s219, %s223
          %s225 = smul.addr %s224, 64
          %s226 = scalar_lea.hbm %s1, %s225
          %s227 = sshll.u32 %s218, 4
          %s228 = int_to_ptr.vmem [resolvable:$true] %s227
          %233 = dma.hbm_to_vmem [thread:$0]  %s226, 128, %s228, %s215, 64, 64, 4
        $region32: #{tpu_custom_call.1} parent=23 // pred_fallthru
          _
      $region24: #{tpu_custom_call.1} parent=5 // pred_fallthru
        _
      %p234 = scmp.le.s32.totalorder 1, %s19
      %p235 = scmp.lt.s32.totalorder %s19, 3
      %p236 = pnand %p234, %p235
      %p237 = pneg %p236
      // Predicated region
      $region33: #{tpu_custom_call.1} parent=5 // pred_check
        _
      $region34: #{tpu_custom_call.1} parent=5 // pred_check_branch
        %239 = sbr.rel (%p236) target = $region36
      $region35: #{tpu_custom_call.1} parent=5 // pred_region
        %s240 = ssub.s32 %s19, 1
        %s241 = sand.u32 %s44, 1
        %s242 = scalar_lea.sflag [#allocation4], %s241
        %s243 = sand.u32 %s44, 1
        %s244 = smul.addr %s243, 16
        %s245 = scalar_lea.vmem [#allocation3], %s244
        // Predicated region
        $region37: #{tpu_custom_call.1} parent=35 // pred_check
          %p246 = pneg %p57
        $region38: #{tpu_custom_call.1} parent=35 // pred_check_branch
          %248 = sbr.rel (%p246) target = $region40
        $region39: #{tpu_custom_call.1} parent=35 // pred_region
          %249 = dma.done %s242, 256
        $region40: #{tpu_custom_call.1} parent=35 // pred_fallthru
          _
        %s250 = sand.u32 %s24, 1
        %s251 = scalar_lea.sflag [#allocation7], %s250
        %s252 = sand.u32 %s72, 1
        %s253 = smul.addr %s252, 8
        %s254 = scalar_lea.vmem [#allocation6], %s253
        // Predicated region
        $region41: #{tpu_custom_call.1} parent=35 // pred_check
          %p255 = pneg %p85
        $region42: #{tpu_custom_call.1} parent=35 // pred_check_branch
          %257 = sbr.rel (%p255) target = $region44
        $region43: #{tpu_custom_call.1} parent=35 // pred_region
          %258 = dma.done %s251, 128
        $region44: #{tpu_custom_call.1} parent=35 // pred_fallthru
          _
        // Predicated region
        $region45: #{tpu_custom_call.1} parent=35 // pred_check
          %p259 = pneg %p106
        $region46: #{tpu_custom_call.1} parent=35 // pred_check_branch
          %261 = sbr.rel (%p259) target = $region48
        $region47: #{tpu_custom_call.1} parent=35 // pred_region
          %262 = dma.done [#allocation7], 256
        $region48: #{tpu_custom_call.1} parent=35 // pred_fallthru
          _
        %s263 = sand.u32 %s44, 1
        %s264 = scalar_lea.sflag [#allocation4], %s263
        %s265 = sand.u32 %s44, 1
        %s266 = smul.addr %s265, 16
        %s267 = scalar_lea.vmem [#allocation3], %s266
        %p268 = pneg %p57
        %p269 = pneg %p54
        %s270 = sand.u32 %s24, 1
        %s271 = scalar_lea.sflag [#allocation7], %s270
        %s272 = sand.u32 %s72, 1
        %s273 = smul.addr %s272, 8
        %s274 = scalar_lea.vmem [#allocation6], %s273
        %p275 = pneg %p85
        %p276 = pneg %p82
        %p277 = pneg %p106
        %p278 = pneg %p103
        %p279 = pneg %p127
        %p280 = pneg %p124
        %p281 = pneg %p155
        %p282 = pneg %p152
        %s283 = sand.u32 %s142, 1
        %s284 = scalar_lea.sflag [#allocation5], %s283
        %s285 = sand.u32 %s142, 1
        %s286 = smul.addr %s285, 16
        %s287 = scalar_lea.vmem [#allocation9], %s286
        %s288 = smul.u32 2, %s29
        %s289 = smul.u32 2, %s29
        %p291 = scmp.eq.s32.totalorder %s29, 0
        // Predicated region
        $region49: #{tpu_custom_call.1} parent=35 // pred_check
          %p292 = pneg %p291
        $region50: #{tpu_custom_call.1} parent=35 // pred_check_branch
          %294 = sbr.rel (%p292) target = $region52
        $region51: #{tpu_custom_call.1} parent=35 // pred_region
          %v295 = vld [vmem:[%s245] sm:$0xff]
          %v296 = vld [vmem:[%s245 + $0x8] sm:$0xff]
          %v297 = vpack.c.bf16 %v296, %v295
          %v298 = vld [vmem:[#allocation8] sm:$0xf]
          %v299 = vld [vmem:[#allocation8 + $0x4] sm:$0xf]
          %v300 = vld [vmem:[#allocation8 + $0x8] sm:$0xf]
          %v301 = vld [vmem:[#allocation8 + $0xc] sm:$0xf]
          %v306 = vunpack.c.l.b16 %v298
          %v307 = vunpack.c.l.b16 %v299
          %v308 = vunpack.c.l.b16 %v300
          %v309 = vunpack.c.l.b16 %v301
          %v310 = vpack.c.b16 %v307, %v306
          %v311 = vpack.c.b16 %v309, %v308
          %vm314 = vcmask 261120
          %v316 = vsel %vm314, %v297, 0
          %318 = vmatprep.subr.bf16.mxu0 0
          %319 = vmatpush1.bf16.msra.mxu0 %v310
          %320 = vmatprep.subr.bf16.mxu0 0
          %321 = vmatpush1.bf16.msra.mxu0 %v311
          %322 = vmatprep.subr.bf16.mxu0 0
          %323 = vmatpush1.bf16.msra.mxu0 0
          %324 = vmatprep.subr.bf16.mxu0 0
          %325 = vmatpush1.bf16.msra.mxu0 0
          %326 = vmatprep.subr.bf16.mxu0 0
          %327 = vmatpush1.bf16.msra.mxu0 0
          %328 = vmatprep.subr.bf16.mxu0 0
          %329 = vmatpush1.bf16.msra.mxu0 0
          %330 = vmatprep.subr.bf16.mxu0 0
          %331 = vmatpush1.bf16.msra.mxu0 0
          %332 = vmatprep.subr.bf16.mxu0 0
          %333 = vmatpush1.bf16.msra.mxu0 0
          %334 = vmatprep.subr.bf16.mxu0 0
          %335 = vmatpush1.bf16.msra.mxu0 0
          %336 = vmatprep.subr.bf16.mxu0 0
          %337 = vmatpush1.bf16.msra.mxu0 0
          %338 = vmatprep.subr.bf16.mxu0 0
          %339 = vmatpush1.bf16.msra.mxu0 0
          %340 = vmatprep.subr.bf16.mxu0 0
          %341 = vmatpush1.bf16.msra.mxu0 0
          %342 = vmatprep.subr.bf16.mxu0 0
          %343 = vmatpush1.bf16.msra.mxu0 0
          %344 = vmatprep.subr.bf16.mxu0 0
          %345 = vmatpush1.bf16.msra.mxu0 0
          %346 = vmatprep.subr.bf16.mxu0 0
          %347 = vmatpush1.bf16.msra.mxu0 0
          %348 = vmatprep.subr.bf16.mxu0 0
          %349 = vmatpush1.bf16.msra.mxu0 0
          %350 = vmatprep.mubr.bf16.mxu0 0
          %351 = vmatmul.mubr.bf16.gmra.mrb[0].mxu0 %v316
          %v352 = vpop.f32.mrb[0].mxu0
          %v353 = vadd.f32 0.0, %v352
          %v354 = vpop.f32.mrb[0].mxu0
          %v355 = vpop.f32.mrb[0].mxu0
          %v356 = vadd.f32 0.0, %v355
          %v357 = vpop.f32.mrb[0].mxu0
          %358 = vdwg.mxu0
          %v359 = vlaneseq
          %v360 = vand.u32 %v359, 127
          %vm361 = vcmp.eq.s32.totalorder %v360, 24
          %v362 = vsel %vm361, 1.0, %v353
          %v363 = vsel %vm361, 1.0, %v356
          %v364 = vpack.c.bf16 %v363, %v362
          %365 = vst [vmem:[#allocation2] sm:$0xff] %v364
        $region52: #{tpu_custom_call.1} parent=35 // pred_fallthru
          _
        %v366 = vld [vmem:[%s254] sm:$0xf]
        %v367 = vld [vmem:[%s254 + $0x4] sm:$0xf]
        %v368 = vld [vmem:[#allocation2] sm:$0xff]
        %v371 = vunpack.c.l.b16 %v366
        %v372 = vunpack.c.l.b16 %v367
        %v373 = vpack.c.b16 %v372, %v371
        %vm374 = vcmask 130048
        %v376 = vsel %vm374, %v373, 0
        %378 = vmatprep.subr.bf16.mxu0 0
        %379 = vmatpush1.bf16.msra.mxu0 %v368
        %380 = vmatprep.subr.bf16.mxu0 0
        %381 = vmatpush1.bf16.msra.mxu0 0
        %382 = vmatprep.subr.bf16.mxu0 0
        %383 = vmatpush1.bf16.msra.mxu0 0
        %384 = vmatprep.subr.bf16.mxu0 0
        %385 = vmatpush1.bf16.msra.mxu0 0
        %386 = vmatprep.subr.bf16.mxu0 0
        %387 = vmatpush1.bf16.msra.mxu0 0
        %388 = vmatprep.subr.bf16.mxu0 0
        %389 = vmatpush1.bf16.msra.mxu0 0
        %390 = vmatprep.subr.bf16.mxu0 0
        %391 = vmatpush1.bf16.msra.mxu0 0
        %392 = vmatprep.subr.bf16.mxu0 0
        %393 = vmatpush1.bf16.msra.mxu0 0
        %394 = vmatprep.subr.bf16.mxu0 0
        %395 = vmatpush1.bf16.msra.mxu0 0
        %396 = vmatprep.subr.bf16.mxu0 0
        %397 = vmatpush1.bf16.msra.mxu0 0
        %398 = vmatprep.subr.bf16.mxu0 0
        %399 = vmatpush1.bf16.msra.mxu0 0
        %400 = vmatprep.subr.bf16.mxu0 0
        %401 = vmatpush1.bf16.msra.mxu0 0
        %402 = vmatprep.subr.bf16.mxu0 0
        %403 = vmatpush1.bf16.msra.mxu0 0
        %404 = vmatprep.subr.bf16.mxu0 0
        %405 = vmatpush1.bf16.msra.mxu0 0
        %406 = vmatprep.subr.bf16.mxu0 0
        %407 = vmatpush1.bf16.msra.mxu0 0
        %408 = vmatprep.subr.bf16.mxu0 0
        %409 = vmatpush1.bf16.msra.mxu0 0
        %410 = vmatprep.mubr.bf16.mxu0 0
        %411 = vmatmul.mubr.bf16.gmra.mrb[0].mxu0 %v376
        %v412 = vpop.f32.mrb[0].mxu0
        %v413 = vadd.f32 0.0, %v412
        %v414 = vpop.f32.mrb[0].mxu0
        %v415 = vpop.f32.mrb[0].mxu0
        %v416 = vadd.f32 0.0, %v415
        %v417 = vpop.f32.mrb[0].mxu0
        %418 = vdwg.mxu0
        %v419 = vadd.f32 %v413, 1.0
        %v420 = vadd.f32 %v416, 1.0
        %v421 = vrcp.pop %v419
        %v422 = vrcp.pop %v420
        %424 = vset.pattern.permute.xlu0 24
        %425 = vperm.xlu0 %424, %v421
        %v426 = vpop.permute.xlu0 %425
        %429 = vset.pattern.permute.xlu0 24
        %430 = vperm.xlu0 %429, %v422
        %v431 = vpop.permute.xlu0 %430
        %v433 = vmul.f32 %v413, %v426
        %v434 = vmul.f32 %v416, %v431
        %v435 = vld [vmem:[%s3] sm:$0x1]
        %v437 = vlaneseq
        %v438 = vshrl.u32 %v437, 7
        %v439 = vsub.s32 0, %v438
        %v440 = vrot.slane %v435, %v439
        %v442 = vadd.f32 %v433, %v440
        %v443 = vadd.f32 %v434, %v440
        %vm444 = vcmask 195584
        %445 = vst.msk [vmem:[%s287] sm:$0xff] %vm444, %v442
        %446 = vst.msk [vmem:[%s287 + $0x8] sm:$0xff] %vm444, %v443
        %s447 = sand.u32 %s142, 1
        %s448 = scalar_lea.sflag [#allocation5], %s447
        %s449 = sand.u32 %s142, 1
        %s450 = smul.addr %s449, 16
        %s451 = scalar_lea.vmem [#allocation9], %s450
        // Predicated region
        $region53: #{tpu_custom_call.1} parent=35 // pred_check
          %p452 = pneg %p152
        $region54: #{tpu_custom_call.1} parent=35 // pred_check_branch
          %454 = sbr.rel (%p452) target = $region56
        $region55: #{tpu_custom_call.1} parent=35 // pred_region
          %s455 = smul.u32 2, %s29
          %s457 = ssub.s32 256, 256
          %458 = vsyncadd %s448, %s457
          %s459 = smul.addr %s28, 2
          %s460 = sadd.s32 %s455, %s459
          %s461 = smul.addr %s460, 128
          %s462 = scalar_lea.hbm %s4, %s461
          %s463 = sshll.u32 %s451, 4
          %s464 = int_to_ptr.vmem [resolvable:$true] %s463
          %469 = dma.vmem_to_hbm [thread:$0]  %s464, 256, %s462, %s448, 128, 128, 8
        $region56: #{tpu_custom_call.1} parent=35 // pred_fallthru
          _
      $region36: #{tpu_custom_call.1} parent=5 // pred_fallthru
        _
      %p470 = scmp.le.s32.totalorder 2, %s19
      // Predicated region
      $region57: #{tpu_custom_call.1} parent=5 // pred_check
        %p471 = pneg %p470
      $region58: #{tpu_custom_call.1} parent=5 // pred_check_branch
        %473 = sbr.rel (%p471) target = $region60
      $region59: #{tpu_custom_call.1} parent=5 // pred_region
        %s474 = ssub.s32 %s19, 2
        // Predicated region
        $region61: #{tpu_custom_call.1} parent=59 // pred_check
          %p475 = pneg %p158
        $region62: #{tpu_custom_call.1} parent=59 // pred_check_branch
          %477 = sbr.rel (%p475) target = $region64
        $region63: #{tpu_custom_call.1} parent=59 // pred_region
          %s478 = sand.u32 %s143, 1
          %s479 = scalar_lea.sflag [#allocation5], %s478
          %s480 = sand.u32 %s143, 1
          %s481 = smul.addr %s480, 16
          %s482 = scalar_lea.vmem [#allocation9], %s481
          %483 = dma.done %s479, 256
        $region64: #{tpu_custom_call.1} parent=59 // pred_fallthru
          _
      $region60: #{tpu_custom_call.1} parent=5 // pred_fallthru
        _
    $region6: #{tpu_custom_call.1} parent=1 // loop_footer
      %s23 = sadd.s32 1, %s19
    $region7: #{tpu_custom_call.1} parent=1 // loop_footer_branch
      %18 = sbr.rel target = $region3
    $region8: #{tpu_custom_call.1} parent=1 // loop_exit
      _
    %484 = vsyncpa [#allocation4], 1
    %s485 = scalar_lea.sflag [#allocation4], 1
    %486 = vsyncpa %s485, 1
    %487 = vsyncpa [#allocation7], 1
    %s488 = scalar_lea.sflag [#allocation7], 1
    %489 = vsyncpa %s488, 1
    %490 = vsyncpa [#allocation5], 1
    %s491 = scalar_lea.sflag [#allocation5], 1
    %492 = vsyncpa %s491, 1

</llo_original>
